<compile_context>
chip_gen: v5e
topology: v5e:2x2
jax: 0.10.0
libtpu: 0.0.40
codegen_flags: <defaults>
</compile_context>

<pallas_src>
import functools
import math

import jax
import jax.numpy as jnp
from jax.experimental import pallas as pl
from jax.experimental.pallas import tpu as pltpu


def _round_up(x, m):
    return ((x + m - 1) // m) * m


def _pathways_kernel(x_ref, mask_ref, w_ref, o_ref, acc_ref, *, compute_dtype):
    """One (tm, tn) output tile, accumulated over the G (reduction) grid axis."""
    k = pl.program_id(2)

    @pl.when(k == 0)
    def _():
        acc_ref[...] = jnp.zeros_like(acc_ref)

    # Mask arrives as int8 (cheap HBM traffic); expand and apply in f32 on the
    # VPU (v5e has no bf16 VPU), then cast only the MXU operands.
    masked = w_ref[...] * mask_ref[...].astype(jnp.float32)
    acc_ref[...] += jnp.dot(
        x_ref[...].astype(compute_dtype),
        masked.astype(compute_dtype),
        preferred_element_type=jnp.float32,
    )

    @pl.when(k == pl.num_programs(2) - 1)
    def _():
        o_ref[...] = acc_ref[...].astype(o_ref.dtype)


def pathways_forward(
    x,
    pathways_mask,
    weight,
    *,
    tm=256,
    tk=512,
    tn=256,
    compute_dtype=jnp.bfloat16,
):
    """x: (B, G) f32, pathways_mask/weight: (G, P) f32 -> (B, P) f32.

    compute_dtype: dtype of the MXU operands (accumulation is always f32).
      Use jnp.float32 for bit-accurate results, jnp.bfloat16 for MXU speed.
    """
    B, G = x.shape
    Gm, P = pathways_mask.shape
    assert G == Gm and weight.shape == (G, P)

    # Shrink tiles for small problems while keeping (8,128)-aligned blocks.
    tm = min(tm, _round_up(B, 8))
    tk = min(tk, _round_up(G, 128))
    tn = min(tn, _round_up(P, 128))

    B_pad = _round_up(B, tm)
    G_pad = _round_up(G, tk)
    P_pad = _round_up(P, tn)

    # Zero-pad ragged edges (padded genes have zero weight -> no contribution;
    # padded batch rows / pathway cols are sliced off below).
    x_p = x
    if (B_pad, G_pad) != (B, G):
        x_p = jnp.pad(x, ((0, B_pad - B), (0, G_pad - G)))

    mask_i8 = pathways_mask.astype(jnp.int8)  # 4x less HBM traffic than f32
    w_p = weight
    if (G_pad, P_pad) != (G, P):
        mask_i8 = jnp.pad(mask_i8, ((0, G_pad - G), (0, P_pad - P)))
        w_p = jnp.pad(weight, ((0, G_pad - G), (0, P_pad - P)))

    grid = (B_pad // tm, P_pad // tn, G_pad // tk)

    out_p = pl.pallas_call(
        functools.partial(_pathways_kernel, compute_dtype=compute_dtype),
        out_shape=jax.ShapeDtypeStruct((B_pad, P_pad), jnp.float32),
        grid=grid,
        in_specs=[
            pl.BlockSpec((tm, tk), lambda i, j, k: (i, k)),  # x tile
            pl.BlockSpec((tk, tn), lambda i, j, k: (k, j)),  # mask tile (int8)
            pl.BlockSpec((tk, tn), lambda i, j, k: (k, j)),  # weight tile
        ],
        out_specs=pl.BlockSpec((tm, tn), lambda i, j, k: (i, j)),
        scratch_shapes=[pltpu.VMEM((tm, tn), jnp.float32)],  # f32 accumulator
        compiler_params=pltpu.CompilerParams(
            dimension_semantics=("parallel", "parallel", "arbitrary"),
        ),
    )(x_p, mask_i8, w_p)

    return out_p[:B, :P]


def kaiming_uniform_a_sqrt5(key, shape):
    """Matches torch.nn.init.kaiming_uniform_(w, a=sqrt(5)) for a 2-D tensor.

    fan_in = shape[1]; gain = sqrt(2 / (1 + a^2)) = sqrt(1/3);
    bound = gain * sqrt(3 / fan_in) = 1 / sqrt(fan_in).
    (PyTorch uses size(1) as fan_in, and the module stores weight as
    (genes, n_pathways), so this matches the original init.)
    """
    fan_in = shape[1]
    bound = 1.0 / math.sqrt(fan_in)
    return jax.random.uniform(
        key, shape, dtype=jnp.float32, minval=-bound, maxval=bound
    )


if __name__ == "__main__":
    key = jax.random.PRNGKey(0)

    def make_problem(k, batch, genes, n_pathways):
        k_mask, k_w, k_x = jax.random.split(k, 3)
        mask = jax.random.bernoulli(
            k_mask, p=0.3, shape=(genes, n_pathways)
        ).astype(jnp.float32)
        w = kaiming_uniform_a_sqrt5(k_w, (genes, n_pathways))
        xs = jax.random.normal(k_x, (batch, genes), dtype=jnp.float32)
        return xs, mask, w

    k_small, k_big = jax.random.split(key)
    # (batch, genes, pathways): tiny demo shape + a multi-tile shape that
    # exercises the tiled grid (2 K-steps, 2 pathway tiles) and the padding.
    for (b, g, p), kk in (((8, 32, 16), k_small), ((64, 1024, 384), k_big)):
        x, mask, w = make_problem(kk, b, g, p)
        ref = jnp.matmul(x, mask * w, precision=jax.lax.Precision.HIGHEST)

        # f32 MXU operands: near bit-accurate (tolerance covers multi-pass MXU f32).
        out_f32 = jax.block_until_ready(
            pathways_forward(x, mask, w, compute_dtype=jnp.float32)
        )
        assert out_f32.shape == (b, p)
        assert jnp.allclose(out_f32, ref, atol=1e-3, rtol=1e-3)

        # bf16 MXU operands (f32 accumulation): relaxed tolerance.
        out_bf16 = jax.block_until_ready(
            pathways_forward(x, mask, w, compute_dtype=jnp.bfloat16)
        )
        assert out_bf16.shape == (b, p)
        assert jnp.allclose(out_bf16, ref, atol=5e-2, rtol=5e-2)

    print("KERNEL_OK")
</pallas_src>

<mosaic_0001>
module attributes {stable_mosaic.version = 11 : i64} {
  func.func @_pathways_kernel(%arg0: i32, %arg1: i32, %arg2: i32, %arg3: memref<8x128xf32, #tpu.memory_space<vmem>>, %arg4: memref<128x128xi8, #tpu.memory_space<vmem>>, %arg5: memref<128x128xf32, #tpu.memory_space<vmem>>, %arg6: memref<8x128xf32, #tpu.memory_space<vmem>>, %arg7: memref<8x128xf32, #tpu.memory_space<vmem>>) attributes {dimension_semantics = [#tpu.dimension_semantics<parallel>, #tpu.dimension_semantics<parallel>, #tpu.dimension_semantics<arbitrary>], iteration_bounds = array<i64: 1, 1, 1>, scalar_prefetch = 0 : i64, scratch_operands = 1 : i64, tpu.core_type = #tpu.core_type<tc>, window_params = [{transform_indices = @transform_0, window_bounds = array<i64: 8, 128>}, {transform_indices = @transform_1, window_bounds = array<i64: 128, 128>}, {transform_indices = @transform_2, window_bounds = array<i64: 128, 128>}, {transform_indices = @transform_3, window_bounds = array<i64: 8, 128>}]} {
    %c0_i32 = arith.constant 0 : i32
    %0 = arith.cmpi eq, %arg2, %c0_i32 : i32
    %1 = arith.extui %0 : i1 to i32
    %c0_i32_0 = arith.constant 0 : i32
    %2 = arith.cmpi ne, %1, %c0_i32_0 : i32
    scf.if %2 {
      %cst_12 = arith.constant 0.000000e+00 : f32
      %15 = vector.broadcast %cst_12 : f32 to vector<8x128xf32>
      %c0_13 = arith.constant 0 : index
      %c0_14 = arith.constant 0 : index
      %16 = vector.load %arg7[%c0_13, %c0_14] : memref<8x128xf32, #tpu.memory_space<vmem>>, vector<8x128xf32>
      tpu.vector_store %arg7[%c0_13, %c0_14], %15 {strides = array<i32>} : memref<8x128xf32, #tpu.memory_space<vmem>>, vector<8x128xf32>,
    } else {
    }
    %c0 = arith.constant 0 : index
    %c0_1 = arith.constant 0 : index
    %3 = vector.load %arg5[%c0, %c0_1] : memref<128x128xf32, #tpu.memory_space<vmem>>, vector<128x128xf32>
    %c0_2 = arith.constant 0 : index
    %c0_3 = arith.constant 0 : index
    %4 = vector.load %arg4[%c0_2, %c0_3] : memref<128x128xi8, #tpu.memory_space<vmem>>, vector<128x128xi8>
    %5 = arith.sitofp %4 : vector<128x128xi8> to vector<128x128xf32>
    %6 = arith.mulf %3, %5 : vector<128x128xf32>
    %c0_4 = arith.constant 0 : index
    %c0_5 = arith.constant 0 : index
    %7 = vector.load %arg7[%c0_4, %c0_5] : memref<8x128xf32, #tpu.memory_space<vmem>>, vector<8x128xf32>
    %c0_6 = arith.constant 0 : index
    %c0_7 = arith.constant 0 : index
    %8 = vector.load %arg3[%c0_6, %c0_7] : memref<8x128xf32, #tpu.memory_space<vmem>>, vector<8x128xf32>
    %cst = arith.constant dense<0.000000e+00> : vector<8x128xf32>
    %9 = tpu.matmul %8, %6, %cst {dimension_numbers = #tpu.dot_dimension_numbers<[1], [0], [0], [1], [0, 0, 1, 1], [], []>} : vector<8x128xf32>, vector<128x128xf32>, vector<8x128xf32> -> vector<8x128xf32>
    %10 = arith.addf %7, %9 : vector<8x128xf32>
    %c0_8 = arith.constant 0 : index
    %c0_9 = arith.constant 0 : index
    %11 = vector.load %arg7[%c0_8, %c0_9] : memref<8x128xf32, #tpu.memory_space<vmem>>, vector<8x128xf32>
    tpu.vector_store %arg7[%c0_8, %c0_9], %10 {strides = array<i32>} : memref<8x128xf32, #tpu.memory_space<vmem>>, vector<8x128xf32>,
    %c0_i32_10 = arith.constant 0 : i32
    %12 = arith.cmpi eq, %arg2, %c0_i32_10 : i32
    %13 = arith.extui %12 : i1 to i32
    %c0_i32_11 = arith.constant 0 : i32
    %14 = arith.cmpi ne, %13, %c0_i32_11 : i32
    scf.if %14 {
      %c0_12 = arith.constant 0 : index
      %c0_13 = arith.constant 0 : index
      %15 = vector.load %arg7[%c0_12, %c0_13] : memref<8x128xf32, #tpu.memory_space<vmem>>, vector<8x128xf32>
      %c0_14 = arith.constant 0 : index
      %c0_15 = arith.constant 0 : index
      %16 = vector.load %arg6[%c0_14, %c0_15] : memref<8x128xf32, #tpu.memory_space<vmem>>, vector<8x128xf32>
      tpu.vector_store %arg6[%c0_14, %c0_15], %15 {strides = array<i32>} : memref<8x128xf32, #tpu.memory_space<vmem>>, vector<8x128xf32>,
    } else {
    }
    return
  }
  func.func @transform_0(%arg0: i32, %arg1: i32, %arg2: i32) -> (i32, i32) {
    %c0_i32 = arith.constant 0 : i32
    return %arg0, %arg2 : i32, i32
  }
  func.func @transform_1(%arg0: i32, %arg1: i32, %arg2: i32) -> (i32, i32) {
    %c0_i32 = arith.constant 0 : i32
    return %arg2, %arg1 : i32, i32
  }
  func.func @transform_2(%arg0: i32, %arg1: i32, %arg2: i32) -> (i32, i32) {
    %c0_i32 = arith.constant 0 : i32
    return %arg2, %arg1 : i32, i32
  }
  func.func @transform_3(%arg0: i32, %arg1: i32, %arg2: i32) -> (i32, i32) {
    %c0_i32 = arith.constant 0 : i32
    return %arg0, %arg1 : i32, i32
  }
}

</mosaic_0001>

<llo_original>
// kernel: tpu_custom_call.1
$region0: #{tpu_custom_call.1}
  #allocation0 [shape = 'u32[]', space=smem, size = 0x4, offset = 0x4, fixed_abs, tag = 'smem constant byte address 0x4 - core index']
  #allocation1 [shape = 'u32[72,128]{1,0:T(1,128)}', space=vmem, size = 0x9000, scoped, tag = 'internal scratch']
  #allocation2 [shape = 'f32[8,128]{1,0:T(8,128)}', space=vmem, size = 0x1000, scoped, tag = 'scratch operand']
  %s0 = inlined_call_operand.hbm [shape: f32[8,128], index: 0, kind: input, shape index: {}]
  %s1 = inlined_call_operand.hbm [shape: s8[128,128], index: 1, kind: input, shape index: {}]
  %s2 = inlined_call_operand.hbm [shape: f32[128,128], index: 2, kind: input, shape index: {}]
  %s3 = inlined_call_operand.hbm [shape: f32[8,128], index: 3, kind: output, shape index: {}]
  %s4 = sld [smem:[#allocation0]]
  $region42: #{tpu_custom_call.1} parent=0
    _
  %s6 = ssub.s32 1, %s4
  %s7 = scalar_select 0, %s6, %s4
  $region1: #{tpu_custom_call.1} parent=0
    #allocation3 [shape = 'u8[4096]{0}', space=vmem, size = 0x1000, scoped, tag = 'input window, operand 0, single buffered']
    #allocation4 [shape = 's32[1]{0}', space=sflag, size = 0x4, scoped, tag = 'scoped memory for tpu_custom_call.1']
    #allocation5 [shape = 's32[1]{0}', space=sflag, size = 0x4, scoped, tag = 'scoped memory for tpu_custom_call.1']
    #allocation6 [shape = 'u8[16384]{0}', space=vmem, size = 0x4000, scoped, tag = 'input window, operand 1, single buffered']
    #allocation7 [shape = 's32[1]{0}', space=sflag, size = 0x4, scoped, tag = 'scoped memory for tpu_custom_call.1']
    #allocation8 [shape = 'u8[65536]{0}', space=vmem, size = 0x10000, scoped, tag = 'input window, operand 2, single buffered']
    #allocation9 [shape = 'u8[4096]{0}', space=vmem, size = 0x1000, scoped, tag = 'output window, operand 0, single buffered']
    %8 = vsyncpa [#allocation4], 0
    %9 = vsyncpa [#allocation7], 0
    %10 = vsyncpa [#allocation5], 0
    // Predicated region
    $region2: #{tpu_custom_call.1} parent=1 // pred_check
      _
    $region3: #{tpu_custom_call.1} parent=1 // pred_check_branch
      %12 = sbr.rel (0) target = $region5
    $region4: #{tpu_custom_call.1} parent=1 // pred_region
      %14 = vsyncadd [#allocation4], 0
      %s16 = sshll.u32 %s0, 4
      %s17 = int_to_ptr.hbm [resolvable:$true] %s16
      %s18 = sshll.u32 [#allocation3], 4
      %s19 = int_to_ptr.vmem [resolvable:$true] %s18
      %21 = dma.hbm_to_vmem [thread:$0]  %s17, 128, %s19, [#allocation4]
    $region5: #{tpu_custom_call.1} parent=1 // pred_fallthru
      _
    // Predicated region
    $region6: #{tpu_custom_call.1} parent=1 // pred_check
      _
    $region7: #{tpu_custom_call.1} parent=1 // pred_check_branch
      %23 = sbr.rel (0) target = $region9
    $region8: #{tpu_custom_call.1} parent=1 // pred_region
      %25 = vsyncadd [#allocation7], 0
      %s26 = sshll.u32 %s1, 4
      %s27 = int_to_ptr.hbm [resolvable:$true] %s26
      %s28 = sshll.u32 [#allocation6], 4
      %s29 = int_to_ptr.vmem [resolvable:$true] %s28
      %34 = dma.hbm_to_vmem [thread:$0]  %s27, 512, %s29, [#allocation7], 128, 128, 8
    $region9: #{tpu_custom_call.1} parent=1 // pred_fallthru
      _
    // Predicated region
    $region10: #{tpu_custom_call.1} parent=1 // pred_check
      _
    $region11: #{tpu_custom_call.1} parent=1 // pred_check_branch
      %36 = sbr.rel (0) target = $region13
    $region12: #{tpu_custom_call.1} parent=1 // pred_region
      %38 = vsyncadd [#allocation7], 0
      %s39 = sshll.u32 %s2, 4
      %s40 = int_to_ptr.hbm [resolvable:$true] %s39
      %s41 = sshll.u32 [#allocation8], 4
      %s42 = int_to_ptr.vmem [resolvable:$true] %s41
      %47 = dma.hbm_to_vmem [thread:$0]  %s40, 2048, %s42, [#allocation7], 128, 128, 8
    $region13: #{tpu_custom_call.1} parent=1 // pred_fallthru
      _
    // Predicated region
    $region14: #{tpu_custom_call.1} parent=1 // pred_check
      _
    $region15: #{tpu_custom_call.1} parent=1 // pred_check_branch
      %49 = sbr.rel (0) target = $region17
    $region16: #{tpu_custom_call.1} parent=1 // pred_region
      %51 = dma.done [#allocation4], 128
    $region17: #{tpu_custom_call.1} parent=1 // pred_fallthru
      _
    // Predicated region
    $region18: #{tpu_custom_call.1} parent=1 // pred_check
      _
    $region19: #{tpu_custom_call.1} parent=1 // pred_check_branch
      %53 = sbr.rel (0) target = $region21
    $region20: #{tpu_custom_call.1} parent=1 // pred_region
      %55 = dma.done [#allocation7], 512
    $region21: #{tpu_custom_call.1} parent=1 // pred_fallthru
      _
    // Predicated region
    $region22: #{tpu_custom_call.1} parent=1 // pred_check
      _
    $region23: #{tpu_custom_call.1} parent=1 // pred_check_branch
      %57 = sbr.rel (0) target = $region25
    $region24: #{tpu_custom_call.1} parent=1 // pred_region
      %59 = dma.done [#allocation7], 2048
    $region25: #{tpu_custom_call.1} parent=1 // pred_fallthru
      _
    %p60 = scmp.eq.s32.totalorder 0, 0
    // Predicated region
    $region26: #{tpu_custom_call.1} parent=1 // pred_check
      %p61 = pneg %p60
    $region27: #{tpu_custom_call.1} parent=1 // pred_check_branch
      %63 = sbr.rel (%p61) target = $region29
    $region28: #{tpu_custom_call.1} parent=1 // pred_region
      %64 = vst [vmem:[#allocation2] sm:$0xff] 0.0
    $region29: #{tpu_custom_call.1} parent=1 // pred_fallthru
      _
    %v65 = vld [vmem:[#allocation8] sm:$0xff]
    %v66 = vld [vmem:[#allocation8 + $0x8] sm:$0xff]
    %v67 = vld [vmem:[#allocation8 + $0x10] sm:$0xff]
    %v68 = vld [vmem:[#allocation8 + $0x18] sm:$0xff]
    %v69 = vld [vmem:[#allocation8 + $0x20] sm:$0xff]
    %v70 = vld [vmem:[#allocation8 + $0x28] sm:$0xff]
    %v71 = vld [vmem:[#allocation8 + $0x30] sm:$0xff]
    %v72 = vld [vmem:[#allocation8 + $0x38] sm:$0xff]
    %v73 = vld [vmem:[#allocation8 + $0x40] sm:$0xff]
    %v74 = vld [vmem:[#allocation8 + $0x48] sm:$0xff]
    %v75 = vld [vmem:[#allocation8 + $0x50] sm:$0xff]
    %v76 = vld [vmem:[#allocation8 + $0x58] sm:$0xff]
    %v77 = vld [vmem:[#allocation8 + $0x60] sm:$0xff]
    %v78 = vld [vmem:[#allocation8 + $0x68] sm:$0xff]
    %v79 = vld [vmem:[#allocation8 + $0x70] sm:$0xff]
    %v80 = vld [vmem:[#allocation8 + $0x78] sm:$0xff]
    %v81 = vld [vmem:[#allocation6] sm:$0xff]
    %v82 = vld [vmem:[#allocation6 + $0x8] sm:$0xff]
    %v83 = vld [vmem:[#allocation6 + $0x10] sm:$0xff]
    %v84 = vld [vmem:[#allocation6 + $0x18] sm:$0xff]
    %v85 = vunpack.c.0.s8 %v81
    %v86 = vunpack.c.1.s8 %v81
    %v87 = vunpack.c.2.s8 %v81
    %v88 = vunpack.c.3.s8 %v81
    %v89 = vunpack.c.0.s8 %v82
    %v90 = vunpack.c.1.s8 %v82
    %v91 = vunpack.c.2.s8 %v82
    %v92 = vunpack.c.3.s8 %v82
    %v93 = vunpack.c.0.s8 %v83
    %v94 = vunpack.c.1.s8 %v83
    %v95 = vunpack.c.2.s8 %v83
    %v96 = vunpack.c.3.s8 %v83
    %v97 = vunpack.c.0.s8 %v84
    %v98 = vunpack.c.1.s8 %v84
    %v99 = vunpack.c.2.s8 %v84
    %v100 = vunpack.c.3.s8 %v84
    %v101 = vcvt.s32.f32 %v85
    %v102 = vcvt.s32.f32 %v86
    %v103 = vcvt.s32.f32 %v87
    %v104 = vcvt.s32.f32 %v88
    %v105 = vcvt.s32.f32 %v89
    %v106 = vcvt.s32.f32 %v90
    %v107 = vcvt.s32.f32 %v91
    %v108 = vcvt.s32.f32 %v92
    %v109 = vcvt.s32.f32 %v93
    %v110 = vcvt.s32.f32 %v94
    %v111 = vcvt.s32.f32 %v95
    %v112 = vcvt.s32.f32 %v96
    %v113 = vcvt.s32.f32 %v97
    %v114 = vcvt.s32.f32 %v98
    %v115 = vcvt.s32.f32 %v99
    %v116 = vcvt.s32.f32 %v100
    %v117 = vmul.f32 %v65, %v101
    %v118 = vmul.f32 %v66, %v102
    %v119 = vmul.f32 %v67, %v103
    %v120 = vmul.f32 %v68, %v104
    %v121 = vmul.f32 %v69, %v105
    %v122 = vmul.f32 %v70, %v106
    %v123 = vmul.f32 %v71, %v107
    %v124 = vmul.f32 %v72, %v108
    %v125 = vmul.f32 %v73, %v109
    %v126 = vmul.f32 %v74, %v110
    %v127 = vmul.f32 %v75, %v111
    %v128 = vmul.f32 %v76, %v112
    %v129 = vmul.f32 %v77, %v113
    %v130 = vmul.f32 %v78, %v114
    %v131 = vmul.f32 %v79, %v115
    %v132 = vmul.f32 %v80, %v116
    %v133 = vld [vmem:[#allocation2] sm:$0xff]
    %v134 = vld [vmem:[#allocation3] sm:$0xff]
    %135 = vmatpush.msra.mxu0 %v132
    %136 = vmatpush.msra.mxu0 %v131
    %137 = vmatpush.msra.mxu0 %v130
    %138 = vmatpush.msra.mxu0 %v129
    %139 = vmatpush.msra.mxu0 %v128
    %140 = vmatpush.msra.mxu0 %v127
    %141 = vmatpush.msra.mxu0 %v126
    %142 = vmatpush.msra.mxu0 %v125
    %143 = vmatpush.msra.mxu0 %v124
    %144 = vmatpush.msra.mxu0 %v123
    %145 = vmatpush.msra.mxu0 %v122
    %146 = vmatpush.msra.mxu0 %v121
    %147 = vmatpush.msra.mxu0 %v120
    %148 = vmatpush.msra.mxu0 %v119
    %149 = vmatpush.msra.mxu0 %v118
    %150 = vmatpush.msra.mxu0 %v117
    %151 = vmatmul.f32.gmra.mxu0 %v134
    %v152 = vpop.f32.mrf.mxu0
    %v153 = vadd.f32 0.0, %v152
    %154 = vdwg.mxu0
    %v155 = vadd.f32 %v133, %v153
    %156 = vst [vmem:[#allocation2] sm:$0xff] %v155
    // Predicated region
    $region30: #{tpu_custom_call.1} parent=1 // pred_check
      %p157 = pneg %p60
    $region31: #{tpu_custom_call.1} parent=1 // pred_check_branch
      %159 = sbr.rel (%p157) target = $region33
    $region32: #{tpu_custom_call.1} parent=1 // pred_region
      %v160 = vld [vmem:[#allocation2] sm:$0xff]
      %161 = vst [vmem:[#allocation9] sm:$0xff] %v160
    $region33: #{tpu_custom_call.1} parent=1 // pred_fallthru
      _
    // Predicated region
    $region34: #{tpu_custom_call.1} parent=1 // pred_check
      _
    $region35: #{tpu_custom_call.1} parent=1 // pred_check_branch
      %163 = sbr.rel (0) target = $region37
    $region36: #{tpu_custom_call.1} parent=1 // pred_region
      %165 = vsyncadd [#allocation5], 0
      %s167 = sshll.u32 [#allocation9], 4
      %s168 = int_to_ptr.vmem [resolvable:$true] %s167
      %s169 = sshll.u32 %s3, 4
      %s170 = int_to_ptr.hbm [resolvable:$true] %s169
      %172 = dma.vmem_to_hbm [thread:$0]  %s168, 128, %s170, [#allocation5]
    $region37: #{tpu_custom_call.1} parent=1 // pred_fallthru
      _
    // Predicated region
    $region38: #{tpu_custom_call.1} parent=1 // pred_check
      _
    $region39: #{tpu_custom_call.1} parent=1 // pred_check_branch
      %174 = sbr.rel (0) target = $region41
    $region40: #{tpu_custom_call.1} parent=1 // pred_region
      %176 = dma.done [#allocation5], 128
    $region41: #{tpu_custom_call.1} parent=1 // pred_fallthru
      _
    %177 = vsyncpa [#allocation4], 1
    %178 = vsyncpa [#allocation7], 1
    %179 = vsyncpa [#allocation5], 1

</llo_original>
